<compile_context>
chip_gen: v5e
topology: v5e:2x2
jax: 0.10.0
libtpu: 0.0.40
codegen_flags: <defaults>
</compile_context>

<pallas_src>
import functools
import math

import jax
import jax.numpy as jnp
from jax.experimental import pallas as pl
from jax.experimental.pallas import tpu as pltpu


def _attention_kernel(x_ref, wqkv_ref, bqkv_ref, wp_ref, bp_ref, out_ref, *,
                      n_heads, block_b, seq_len):
    # x_ref: (block_b * T, C) rows for this batch block.
    M, C = x_ref.shape
    T = seq_len
    H = n_heads
    D = C // H
    scale = 1.0 / math.sqrt(D)

    # Fused QKV projection for the whole batch block (bf16 operands, f32 acc).
    x = x_ref[...].astype(jnp.bfloat16)
    wqkv = wqkv_ref[...].astype(jnp.bfloat16)
    qkv = jnp.dot(x, wqkv, preferred_element_type=jnp.float32) + bqkv_ref[...]

    q = qkv[:, :C] * scale            # scale on q (T*C elems), not on scores
    k = qkv[:, C:2 * C]
    v = qkv[:, 2 * C:]

    # Causal mask generated in-kernel, hoisted out of the head loop.
    row = jax.lax.broadcasted_iota(jnp.int32, (T, T), 0)
    col = jax.lax.broadcasted_iota(jnp.int32, (T, T), 1)
    keep = (row >= col)[None, :, :]   # (1, T, T), broadcast over batch
    neg = jnp.float32(-1e30)          # finite -> no NaN even for masked rows

    head_outs = []
    for h in range(H):                # static loop over heads; each iteration is
        sl = slice(h * D, (h + 1) * D)  # batched over the whole batch block
        qh = q[:, sl].reshape(block_b, T, D).astype(jnp.bfloat16)
        kh = k[:, sl].reshape(block_b, T, D).astype(jnp.bfloat16)
        vh = v[:, sl].reshape(block_b, T, D).astype(jnp.bfloat16)

        s = jnp.einsum("bqd,bkd->bqk", qh, kh,
                       preferred_element_type=jnp.float32)       # (Bb, T, T)
        s = jnp.where(keep, s, neg)

        # numerically-stable softmax (f32); normalisation via EUP reciprocal
        m = jnp.max(s, axis=-1, keepdims=True)
        e = jnp.exp(s - m)
        p = e * pl.reciprocal(jnp.sum(e, axis=-1, keepdims=True), approx=True)

        ah = jnp.einsum("bqk,bkd->bqd", p.astype(jnp.bfloat16), vh,
                        preferred_element_type=jnp.float32)      # (Bb, T, D)
        head_outs.append(ah.reshape(M, D))

    # concat heads back to (M, C) == transpose(1,2).view(B,T,N*D) in torch
    attn = jnp.concatenate(head_outs, axis=-1).astype(jnp.bfloat16)

    # output projection (bf16 operands, f32 accumulation)
    out = jnp.dot(attn, wp_ref[...].astype(jnp.bfloat16),
                  preferred_element_type=jnp.float32) + bp_ref[...]

    # TODO(synk): att_drop / proj_drop are identity (eval mode / drop_p=0).
    out_ref[...] = out.astype(out_ref.dtype)


def masked_causal_attention(x, params, n_heads, block_b=None):
    """x: (B, T, C) float32; params: dict of (in,out)-layout weights & (1,C) biases."""
    B, T, C = x.shape

    if block_b is None:
        # Target >= ~256 rows per program so the MXU sees full passes, but keep
        # block_b a divisor of B so the grid tiles exactly.
        block_b = min(B, max(1, 256 // T))
        while B % block_b:
            block_b -= 1
    assert B % block_b == 0
    rows = block_b * T

    # Fuse Q/K/V weights/biases into one (C, 3C) projection in the wrapper.
    wqkv = jnp.concatenate([params["wq"], params["wk"], params["wv"]], axis=1)
    bqkv = jnp.concatenate([params["bq"], params["bk"], params["bv"]], axis=1)

    # Fold batch into the matmul M dimension (free, contiguous reshape).
    x2 = x.reshape(B * T, C)

    kernel = functools.partial(_attention_kernel, n_heads=n_heads,
                               block_b=block_b, seq_len=T)
    const2d = lambda shape: pl.BlockSpec(shape, lambda b: (0, 0))

    # TODO(synk): mgdt=True / custom att_mask variants would need the mask (or a
    # column mask) passed in; the default causal mask is generated in-kernel.
    out2 = pl.pallas_call(
        kernel,
        out_shape=jax.ShapeDtypeStruct((B * T, C), x.dtype),
        grid_spec=pltpu.PrefetchScalarGridSpec(
            num_scalar_prefetch=0,
            grid=(B // block_b,),
            in_specs=[
                pl.BlockSpec((rows, C), lambda b: (b, 0)),   # x (batch block)
                const2d((C, 3 * C)),                         # Wqkv
                const2d((1, 3 * C)),                         # bqkv
                const2d((C, C)),                             # Wproj
                const2d((1, C)),                             # bproj
            ],
            out_specs=pl.BlockSpec((rows, C), lambda b: (b, 0)),
        ),
        compiler_params=pltpu.CompilerParams(
            dimension_semantics=("parallel",),
            vmem_limit_bytes=32 * 1024 * 1024,
        ),
    )(x2, wqkv, bqkv, params["wp"], params["bp"])

    return out2.reshape(B, T, C)


def _reference(x, params, n_heads):
    """Pure-JAX f32 reference mirroring the PyTorch forward (eval mode)."""
    B, T, C = x.shape
    D = C // n_heads
    lin = lambda t, w, b: t @ w + b
    q = lin(x, params["wq"], params["bq"]).reshape(B, T, n_heads, D).transpose(0, 2, 1, 3)
    k = lin(x, params["wk"], params["bk"]).reshape(B, T, n_heads, D).transpose(0, 2, 1, 3)
    v = lin(x, params["wv"], params["bv"]).reshape(B, T, n_heads, D).transpose(0, 2, 1, 3)
    mask = jnp.tril(jnp.ones((T, T), jnp.float32))
    w = jnp.einsum("bntd,bnsd->bnts", q, k) / math.sqrt(D)
    w = jnp.where(mask[None, None] == 0, -jnp.inf, w)
    p = jax.nn.softmax(w, axis=-1)
    attn = jnp.einsum("bnts,bnsd->bntd", p, v).transpose(0, 2, 1, 3).reshape(B, T, C)
    return lin(attn, params["wp"], params["bp"])


if __name__ == "__main__":
    # Small shapes consistent with the module's forward.
    B, T = 2, 8
    h_dim = 32
    n_heads = 4

    key = jax.random.PRNGKey(0)
    keys = jax.random.split(key, 9)

    # nn.Linear weight is (out,in); we store the transposed (in,out) layout so
    # the kernel does x @ W directly.
    def init_linear(kw, kb, fan_in, fan_out):
        bound = 1.0 / math.sqrt(fan_in)
        w = jax.random.uniform(kw, (fan_in, fan_out), jnp.float32, -bound, bound)
        b = jax.random.uniform(kb, (1, fan_out), jnp.float32, -bound, bound)
        return w, b

    wq, bq = init_linear(keys[0], keys[1], h_dim, h_dim)
    wk, bk = init_linear(keys[2], keys[3], h_dim, h_dim)
    wv, bv = init_linear(keys[4], keys[5], h_dim, h_dim)
    wp, bp = init_linear(keys[6], keys[7], h_dim, h_dim)
    params = {"wq": wq, "bq": bq, "wk": wk, "bk": bk,
              "wv": wv, "bv": bv, "wp": wp, "bp": bp}

    x = jax.random.normal(keys[8], (B, T, h_dim), jnp.float32)

    out = masked_causal_attention(x, params, n_heads)
    out = jax.block_until_ready(out)

    ref = _reference(x, params, n_heads)
    assert out.shape == (B, T, h_dim)
    # bf16 MXU operands (f32 accumulation) -> compare with a bf16-level tolerance.
    max_err = jnp.max(jnp.abs(out - ref))
    assert jnp.allclose(out, ref, atol=5e-2, rtol=5e-2), (
        f"mismatch vs reference (max abs err {max_err})")

    print("KERNEL_OK")
</pallas_src>

<mosaic_0001>
module attributes {stable_mosaic.version = 11 : i64} {
  func.func @_attention_kernel(%arg0: i32, %arg1: memref<16x32xf32, #tpu.memory_space<vmem>>, %arg2: memref<32x96xf32, #tpu.memory_space<vmem>>, %arg3: memref<1x96xf32, #tpu.memory_space<vmem>>, %arg4: memref<32x32xf32, #tpu.memory_space<vmem>>, %arg5: memref<1x32xf32, #tpu.memory_space<vmem>>, %arg6: memref<16x32xf32, #tpu.memory_space<vmem>>) attributes {dimension_semantics = [#tpu.dimension_semantics<parallel>], iteration_bounds = array<i64: 1>, scalar_prefetch = 0 : i64, scratch_operands = 0 : i64, tpu.core_type = #tpu.core_type<tc>, window_params = [{transform_indices = @transform_0, window_bounds = array<i64: 16, 32>}, {pipeline_mode = #tpu.pipeline_mode<synchronous>, transform_indices = @transform_1, window_bounds = array<i64: 32, 96>}, {pipeline_mode = #tpu.pipeline_mode<synchronous>, transform_indices = @transform_2, window_bounds = array<i64: 1, 96>}, {pipeline_mode = #tpu.pipeline_mode<synchronous>, transform_indices = @transform_3, window_bounds = array<i64: 32, 32>}, {pipeline_mode = #tpu.pipeline_mode<synchronous>, transform_indices = @transform_4, window_bounds = array<i64: 1, 32>}, {transform_indices = @transform_5, window_bounds = array<i64: 16, 32>}]} {
    %c0 = arith.constant 0 : index
    %c0_0 = arith.constant 0 : index
    %0 = vector.load %arg1[%c0, %c0_0] : memref<16x32xf32, #tpu.memory_space<vmem>>, vector<16x32xf32>
    %1 = arith.truncf %0 : vector<16x32xf32> to vector<16x32xbf16>
    %c0_1 = arith.constant 0 : index
    %c0_2 = arith.constant 0 : index
    %2 = vector.load %arg2[%c0_1, %c0_2] : memref<32x96xf32, #tpu.memory_space<vmem>>, vector<32x96xf32>
    %3 = arith.truncf %2 : vector<32x96xf32> to vector<32x96xbf16>
    %cst = arith.constant dense<0.000000e+00> : vector<16x96xf32>
    %4 = tpu.matmul %1, %3, %cst {dimension_numbers = #tpu.dot_dimension_numbers<[1], [0], [0], [1], [0, 0, 1, 1], [], []>} : vector<16x32xbf16>, vector<32x96xbf16>, vector<16x96xf32> -> vector<16x96xf32>
    %c0_3 = arith.constant 0 : index
    %c0_4 = arith.constant 0 : index
    %5 = vector.load %arg3[%c0_3, %c0_4] : memref<1x96xf32, #tpu.memory_space<vmem>>, vector<1x96xf32>
    %6 = vector.broadcast %5 : vector<1x96xf32> to vector<16x96xf32>
    %7 = arith.addf %4, %6 : vector<16x96xf32>
    %8 = vector.extract_strided_slice %7 {offsets = [0, 0], sizes = [16, 32], strides = [1, 1]} : vector<16x96xf32> to vector<16x32xf32>
    %cst_5 = arith.constant 0.353553385 : f32
    %9 = vector.broadcast %cst_5 : f32 to vector<16x32xf32>
    %10 = arith.mulf %8, %9 : vector<16x32xf32>
    %11 = vector.extract_strided_slice %7 {offsets = [0, 32], sizes = [16, 32], strides = [1, 1]} : vector<16x96xf32> to vector<16x32xf32>
    %12 = vector.extract_strided_slice %7 {offsets = [0, 64], sizes = [16, 32], strides = [1, 1]} : vector<16x96xf32> to vector<16x32xf32>
    %13 = tpu.iota {dimensions = array<i32: 0>} : vector<8x8xi32>
    %14 = tpu.iota {dimensions = array<i32: 1>} : vector<8x8xi32>
    %15 = arith.cmpi sge, %13, %14 : vector<8x8xi32>
    %16 = vector.shape_cast %15 : vector<8x8xi1> to vector<1x8x8xi1>
    %17 = vector.extract_strided_slice %10 {offsets = [0, 0], sizes = [16, 8], strides = [1, 1]} : vector<16x32xf32> to vector<16x8xf32>
    %18 = vector.shape_cast %17 : vector<16x8xf32> to vector<2x8x8xf32>
    %19 = arith.truncf %18 : vector<2x8x8xf32> to vector<2x8x8xbf16>
    %20 = vector.extract_strided_slice %11 {offsets = [0, 0], sizes = [16, 8], strides = [1, 1]} : vector<16x32xf32> to vector<16x8xf32>
    %21 = vector.shape_cast %20 : vector<16x8xf32> to vector<2x8x8xf32>
    %22 = arith.truncf %21 : vector<2x8x8xf32> to vector<2x8x8xbf16>
    %23 = vector.extract_strided_slice %12 {offsets = [0, 0], sizes = [16, 8], strides = [1, 1]} : vector<16x32xf32> to vector<16x8xf32>
    %24 = vector.shape_cast %23 : vector<16x8xf32> to vector<2x8x8xf32>
    %25 = arith.truncf %24 : vector<2x8x8xf32> to vector<2x8x8xbf16>
    "tpu.trace_start"() <{level = 10 : i32, message = "bqd,bkd->bqk"}> : () -> ()
    %cst_6 = arith.constant dense<0.000000e+00> : vector<2x8x8xf32>
    %26 = tpu.matmul %19, %22, %cst_6 {dimension_numbers = #tpu.dot_dimension_numbers<[2], [2], [1], [1], [0, 0, 0, 1, 1, 1], [0], [0]>} : vector<2x8x8xbf16>, vector<2x8x8xbf16>, vector<2x8x8xf32> -> vector<2x8x8xf32>
    %cst_7 = arith.constant -1.000000e+30 : f32
    "tpu.trace_stop"() : () -> ()
    %27 = vector.shape_cast %16 : vector<1x8x8xi1> to vector<1x8x8xi1>
    %28 = vector.broadcast %27 : vector<1x8x8xi1> to vector<2x8x8xi1>
    %29 = vector.broadcast %cst_7 : f32 to vector<2x8x8xf32>
    %30 = arith.select %28, %26, %29 : vector<2x8x8xi1>, vector<2x8x8xf32>
    %cst_8 = arith.constant dense<0xFF800000> : vector<2x8xf32>
    %31 = vector.multi_reduction <maximumf>, %30, %cst_8 [2] : vector<2x8x8xf32> to vector<2x8xf32>
    %32 = vector.shape_cast %31 : vector<2x8xf32> to vector<2x8x1xf32>
    %33 = vector.broadcast %32 : vector<2x8x1xf32> to vector<2x8x8xf32>
    %34 = arith.subf %30, %33 : vector<2x8x8xf32>
    %35 = math.exp %34 : vector<2x8x8xf32>
    %cst_9 = arith.constant dense<0.000000e+00> : vector<2x8xf32>
    %36 = vector.multi_reduction <add>, %35, %cst_9 [2] : vector<2x8x8xf32> to vector<2x8xf32>
    %37 = vector.shape_cast %36 : vector<2x8xf32> to vector<2x8x1xf32>
    %38 = tpu.reciprocal %37 {approx = true} : vector<2x8x1xf32> -> vector<2x8x1xf32>
    %39 = vector.broadcast %38 : vector<2x8x1xf32> to vector<2x8x8xf32>
    %40 = arith.mulf %35, %39 : vector<2x8x8xf32>
    %41 = arith.truncf %40 : vector<2x8x8xf32> to vector<2x8x8xbf16>
    "tpu.trace_start"() <{level = 10 : i32, message = "bqk,bkd->bqd"}> : () -> ()
    %cst_10 = arith.constant dense<0.000000e+00> : vector<2x8x8xf32>
    %42 = tpu.matmul %41, %25, %cst_10 {dimension_numbers = #tpu.dot_dimension_numbers<[2], [1], [1], [2], [0, 0, 0, 1, 1, 2], [0], [0]>} : vector<2x8x8xbf16>, vector<2x8x8xbf16>, vector<2x8x8xf32> -> vector<2x8x8xf32>
    "tpu.trace_stop"() : () -> ()
    %43 = vector.shape_cast %42 : vector<2x8x8xf32> to vector<16x8xf32>
    %44 = vector.extract_strided_slice %10 {offsets = [0, 8], sizes = [16, 8], strides = [1, 1]} : vector<16x32xf32> to vector<16x8xf32>
    %45 = vector.shape_cast %44 : vector<16x8xf32> to vector<2x8x8xf32>
    %46 = arith.truncf %45 : vector<2x8x8xf32> to vector<2x8x8xbf16>
    %47 = vector.extract_strided_slice %11 {offsets = [0, 8], sizes = [16, 8], strides = [1, 1]} : vector<16x32xf32> to vector<16x8xf32>
    %48 = vector.shape_cast %47 : vector<16x8xf32> to vector<2x8x8xf32>
    %49 = arith.truncf %48 : vector<2x8x8xf32> to vector<2x8x8xbf16>
    %50 = vector.extract_strided_slice %12 {offsets = [0, 8], sizes = [16, 8], strides = [1, 1]} : vector<16x32xf32> to vector<16x8xf32>
    %51 = vector.shape_cast %50 : vector<16x8xf32> to vector<2x8x8xf32>
    %52 = arith.truncf %51 : vector<2x8x8xf32> to vector<2x8x8xbf16>
    "tpu.trace_start"() <{level = 10 : i32, message = "bqd,bkd->bqk"}> : () -> ()
    %cst_11 = arith.constant dense<0.000000e+00> : vector<2x8x8xf32>
    %53 = tpu.matmul %46, %49, %cst_11 {dimension_numbers = #tpu.dot_dimension_numbers<[2], [2], [1], [1], [0, 0, 0, 1, 1, 1], [0], [0]>} : vector<2x8x8xbf16>, vector<2x8x8xbf16>, vector<2x8x8xf32> -> vector<2x8x8xf32>
    %cst_12 = arith.constant -1.000000e+30 : f32
    "tpu.trace_stop"() : () -> ()
    %54 = vector.shape_cast %16 : vector<1x8x8xi1> to vector<1x8x8xi1>
    %55 = vector.broadcast %54 : vector<1x8x8xi1> to vector<2x8x8xi1>
    %56 = vector.broadcast %cst_12 : f32 to vector<2x8x8xf32>
    %57 = arith.select %55, %53, %56 : vector<2x8x8xi1>, vector<2x8x8xf32>
    %cst_13 = arith.constant dense<0xFF800000> : vector<2x8xf32>
    %58 = vector.multi_reduction <maximumf>, %57, %cst_13 [2] : vector<2x8x8xf32> to vector<2x8xf32>
    %59 = vector.shape_cast %58 : vector<2x8xf32> to vector<2x8x1xf32>
    %60 = vector.broadcast %59 : vector<2x8x1xf32> to vector<2x8x8xf32>
    %61 = arith.subf %57, %60 : vector<2x8x8xf32>
    %62 = math.exp %61 : vector<2x8x8xf32>
    %cst_14 = arith.constant dense<0.000000e+00> : vector<2x8xf32>
    %63 = vector.multi_reduction <add>, %62, %cst_14 [2] : vector<2x8x8xf32> to vector<2x8xf32>
    %64 = vector.shape_cast %63 : vector<2x8xf32> to vector<2x8x1xf32>
    %65 = tpu.reciprocal %64 {approx = true} : vector<2x8x1xf32> -> vector<2x8x1xf32>
    %66 = vector.broadcast %65 : vector<2x8x1xf32> to vector<2x8x8xf32>
    %67 = arith.mulf %62, %66 : vector<2x8x8xf32>
    %68 = arith.truncf %67 : vector<2x8x8xf32> to vector<2x8x8xbf16>
    "tpu.trace_start"() <{level = 10 : i32, message = "bqk,bkd->bqd"}> : () -> ()
    %cst_15 = arith.constant dense<0.000000e+00> : vector<2x8x8xf32>
    %69 = tpu.matmul %68, %52, %cst_15 {dimension_numbers = #tpu.dot_dimension_numbers<[2], [1], [1], [2], [0, 0, 0, 1, 1, 2], [0], [0]>} : vector<2x8x8xbf16>, vector<2x8x8xbf16>, vector<2x8x8xf32> -> vector<2x8x8xf32>
    "tpu.trace_stop"() : () -> ()
    %70 = vector.shape_cast %69 : vector<2x8x8xf32> to vector<16x8xf32>
    %71 = vector.extract_strided_slice %10 {offsets = [0, 16], sizes = [16, 8], strides = [1, 1]} : vector<16x32xf32> to vector<16x8xf32>
    %72 = vector.shape_cast %71 : vector<16x8xf32> to vector<2x8x8xf32>
    %73 = arith.truncf %72 : vector<2x8x8xf32> to vector<2x8x8xbf16>
    %74 = vector.extract_strided_slice %11 {offsets = [0, 16], sizes = [16, 8], strides = [1, 1]} : vector<16x32xf32> to vector<16x8xf32>
    %75 = vector.shape_cast %74 : vector<16x8xf32> to vector<2x8x8xf32>
    %76 = arith.truncf %75 : vector<2x8x8xf32> to vector<2x8x8xbf16>
    %77 = vector.extract_strided_slice %12 {offsets = [0, 16], sizes = [16, 8], strides = [1, 1]} : vector<16x32xf32> to vector<16x8xf32>
    %78 = vector.shape_cast %77 : vector<16x8xf32> to vector<2x8x8xf32>
    %79 = arith.truncf %78 : vector<2x8x8xf32> to vector<2x8x8xbf16>
    "tpu.trace_start"() <{level = 10 : i32, message = "bqd,bkd->bqk"}> : () -> ()
    %cst_16 = arith.constant dense<0.000000e+00> : vector<2x8x8xf32>
    %80 = tpu.matmul %73, %76, %cst_16 {dimension_numbers = #tpu.dot_dimension_numbers<[2], [2], [1], [1], [0, 0, 0, 1, 1, 1], [0], [0]>} : vector<2x8x8xbf16>, vector<2x8x8xbf16>, vector<2x8x8xf32> -> vector<2x8x8xf32>
    %cst_17 = arith.constant -1.000000e+30 : f32
    "tpu.trace_stop"() : () -> ()
    %81 = vector.shape_cast %16 : vector<1x8x8xi1> to vector<1x8x8xi1>
    %82 = vector.broadcast %81 : vector<1x8x8xi1> to vector<2x8x8xi1>
    %83 = vector.broadcast %cst_17 : f32 to vector<2x8x8xf32>
    %84 = arith.select %82, %80, %83 : vector<2x8x8xi1>, vector<2x8x8xf32>
    %cst_18 = arith.constant dense<0xFF800000> : vector<2x8xf32>
    %85 = vector.multi_reduction <maximumf>, %84, %cst_18 [2] : vector<2x8x8xf32> to vector<2x8xf32>
    %86 = vector.shape_cast %85 : vector<2x8xf32> to vector<2x8x1xf32>
    %87 = vector.broadcast %86 : vector<2x8x1xf32> to vector<2x8x8xf32>
    %88 = arith.subf %84, %87 : vector<2x8x8xf32>
    %89 = math.exp %88 : vector<2x8x8xf32>
    %cst_19 = arith.constant dense<0.000000e+00> : vector<2x8xf32>
    %90 = vector.multi_reduction <add>, %89, %cst_19 [2] : vector<2x8x8xf32> to vector<2x8xf32>
    %91 = vector.shape_cast %90 : vector<2x8xf32> to vector<2x8x1xf32>
    %92 = tpu.reciprocal %91 {approx = true} : vector<2x8x1xf32> -> vector<2x8x1xf32>
    %93 = vector.broadcast %92 : vector<2x8x1xf32> to vector<2x8x8xf32>
    %94 = arith.mulf %89, %93 : vector<2x8x8xf32>
    %95 = arith.truncf %94 : vector<2x8x8xf32> to vector<2x8x8xbf16>
    "tpu.trace_start"() <{level = 10 : i32, message = "bqk,bkd->bqd"}> : () -> ()
    %cst_20 = arith.constant dense<0.000000e+00> : vector<2x8x8xf32>
    %96 = tpu.matmul %95, %79, %cst_20 {dimension_numbers = #tpu.dot_dimension_numbers<[2], [1], [1], [2], [0, 0, 0, 1, 1, 2], [0], [0]>} : vector<2x8x8xbf16>, vector<2x8x8xbf16>, vector<2x8x8xf32> -> vector<2x8x8xf32>
    "tpu.trace_stop"() : () -> ()
    %97 = vector.shape_cast %96 : vector<2x8x8xf32> to vector<16x8xf32>
    %98 = vector.extract_strided_slice %10 {offsets = [0, 24], sizes = [16, 8], strides = [1, 1]} : vector<16x32xf32> to vector<16x8xf32>
    %99 = vector.shape_cast %98 : vector<16x8xf32> to vector<2x8x8xf32>
    %100 = arith.truncf %99 : vector<2x8x8xf32> to vector<2x8x8xbf16>
    %101 = vector.extract_strided_slice %11 {offsets = [0, 24], sizes = [16, 8], strides = [1, 1]} : vector<16x32xf32> to vector<16x8xf32>
    %102 = vector.shape_cast %101 : vector<16x8xf32> to vector<2x8x8xf32>
    %103 = arith.truncf %102 : vector<2x8x8xf32> to vector<2x8x8xbf16>
    %104 = vector.extract_strided_slice %12 {offsets = [0, 24], sizes = [16, 8], strides = [1, 1]} : vector<16x32xf32> to vector<16x8xf32>
    %105 = vector.shape_cast %104 : vector<16x8xf32> to vector<2x8x8xf32>
    %106 = arith.truncf %105 : vector<2x8x8xf32> to vector<2x8x8xbf16>
    "tpu.trace_start"() <{level = 10 : i32, message = "bqd,bkd->bqk"}> : () -> ()
    %cst_21 = arith.constant dense<0.000000e+00> : vector<2x8x8xf32>
    %107 = tpu.matmul %100, %103, %cst_21 {dimension_numbers = #tpu.dot_dimension_numbers<[2], [2], [1], [1], [0, 0, 0, 1, 1, 1], [0], [0]>} : vector<2x8x8xbf16>, vector<2x8x8xbf16>, vector<2x8x8xf32> -> vector<2x8x8xf32>
    %cst_22 = arith.constant -1.000000e+30 : f32
    "tpu.trace_stop"() : () -> ()
    %108 = vector.shape_cast %16 : vector<1x8x8xi1> to vector<1x8x8xi1>
    %109 = vector.broadcast %108 : vector<1x8x8xi1> to vector<2x8x8xi1>
    %110 = vector.broadcast %cst_22 : f32 to vector<2x8x8xf32>
    %111 = arith.select %109, %107, %110 : vector<2x8x8xi1>, vector<2x8x8xf32>
    %cst_23 = arith.constant dense<0xFF800000> : vector<2x8xf32>
    %112 = vector.multi_reduction <maximumf>, %111, %cst_23 [2] : vector<2x8x8xf32> to vector<2x8xf32>
    %113 = vector.shape_cast %112 : vector<2x8xf32> to vector<2x8x1xf32>
    %114 = vector.broadcast %113 : vector<2x8x1xf32> to vector<2x8x8xf32>
    %115 = arith.subf %111, %114 : vector<2x8x8xf32>
    %116 = math.exp %115 : vector<2x8x8xf32>
    %cst_24 = arith.constant dense<0.000000e+00> : vector<2x8xf32>
    %117 = vector.multi_reduction <add>, %116, %cst_24 [2] : vector<2x8x8xf32> to vector<2x8xf32>
    %118 = vector.shape_cast %117 : vector<2x8xf32> to vector<2x8x1xf32>
    %119 = tpu.reciprocal %118 {approx = true} : vector<2x8x1xf32> -> vector<2x8x1xf32>
    %120 = vector.broadcast %119 : vector<2x8x1xf32> to vector<2x8x8xf32>
    %121 = arith.mulf %116, %120 : vector<2x8x8xf32>
    %122 = arith.truncf %121 : vector<2x8x8xf32> to vector<2x8x8xbf16>
    "tpu.trace_start"() <{level = 10 : i32, message = "bqk,bkd->bqd"}> : () -> ()
    %cst_25 = arith.constant dense<0.000000e+00> : vector<2x8x8xf32>
    %123 = tpu.matmul %122, %106, %cst_25 {dimension_numbers = #tpu.dot_dimension_numbers<[2], [1], [1], [2], [0, 0, 0, 1, 1, 2], [0], [0]>} : vector<2x8x8xbf16>, vector<2x8x8xbf16>, vector<2x8x8xf32> -> vector<2x8x8xf32>
    "tpu.trace_stop"() : () -> ()
    %124 = vector.shape_cast %123 : vector<2x8x8xf32> to vector<16x8xf32>
    %125 = tpu.concatenate %43, %70, %97, %124 in 1 : vector<16x8xf32>, vector<16x8xf32>, vector<16x8xf32>, vector<16x8xf32> -> vector<16x32xf32>
    %126 = arith.truncf %125 : vector<16x32xf32> to vector<16x32xbf16>
    %c0_26 = arith.constant 0 : index
    %c0_27 = arith.constant 0 : index
    %127 = vector.load %arg4[%c0_26, %c0_27] : memref<32x32xf32, #tpu.memory_space<vmem>>, vector<32x32xf32>
    %128 = arith.truncf %127 : vector<32x32xf32> to vector<32x32xbf16>
    %cst_28 = arith.constant dense<0.000000e+00> : vector<16x32xf32>
    %129 = tpu.matmul %126, %128, %cst_28 {dimension_numbers = #tpu.dot_dimension_numbers<[1], [0], [0], [1], [0, 0, 1, 1], [], []>} : vector<16x32xbf16>, vector<32x32xbf16>, vector<16x32xf32> -> vector<16x32xf32>
    %c0_29 = arith.constant 0 : index
    %c0_30 = arith.constant 0 : index
    %130 = vector.load %arg5[%c0_29, %c0_30] : memref<1x32xf32, #tpu.memory_space<vmem>>, vector<1x32xf32>
    %131 = vector.broadcast %130 : vector<1x32xf32> to vector<16x32xf32>
    %132 = arith.addf %129, %131 : vector<16x32xf32>
    %c0_31 = arith.constant 0 : index
    %c0_32 = arith.constant 0 : index
    %133 = vector.load %arg6[%c0_31, %c0_32] : memref<16x32xf32, #tpu.memory_space<vmem>>, vector<16x32xf32>
    tpu.vector_store %arg6[%c0_31, %c0_32], %132 {strides = array<i32>} : memref<16x32xf32, #tpu.memory_space<vmem>>, vector<16x32xf32>,
    return
  }
  func.func @transform_0(%arg0: i32) -> (i32, i32) {
    %c0_i32 = arith.constant 0 : i32
    %c0_i32_0 = arith.constant 0 : i32
    return %arg0, %c0_i32 : i32, i32
  }
  func.func @transform_1(%arg0: i32) -> (i32, i32) {
    %c0_i32 = arith.constant 0 : i32
    %c0_i32_0 = arith.constant 0 : i32
    %c0_i32_1 = arith.constant 0 : i32
    return %c0_i32, %c0_i32_0 : i32, i32
  }
  func.func @transform_2(%arg0: i32) -> (i32, i32) {
    %c0_i32 = arith.constant 0 : i32
    %c0_i32_0 = arith.constant 0 : i32
    %c0_i32_1 = arith.constant 0 : i32
    return %c0_i32, %c0_i32_0 : i32, i32
  }
  func.func @transform_3(%arg0: i32) -> (i32, i32) {
    %c0_i32 = arith.constant 0 : i32
    %c0_i32_0 = arith.constant 0 : i32
    %c0_i32_1 = arith.constant 0 : i32
    return %c0_i32, %c0_i32_0 : i32, i32
  }
  func.func @transform_4(%arg0: i32) -> (i32, i32) {
    %c0_i32 = arith.constant 0 : i32
    %c0_i32_0 = arith.constant 0 : i32
    %c0_i32_1 = arith.constant 0 : i32
    return %c0_i32, %c0_i32_0 : i32, i32
  }
  func.func @transform_5(%arg0: i32) -> (i32, i32) {
    %c0_i32 = arith.constant 0 : i32
    %c0_i32_0 = arith.constant 0 : i32
    return %arg0, %c0_i32 : i32, i32
  }
}

</mosaic_0001>

<llo_original>
// kernel: tpu_custom_call.1
$region0: #{tpu_custom_call.1}
  #allocation0 [shape = 'u32[]', space=smem, size = 0x4, offset = 0x4, fixed_abs, tag = 'smem constant byte address 0x4 - core index']
  #allocation1 [shape = 'u32[72,128]{1,0:T(1,128)}', space=vmem, size = 0x9000, scoped, tag = 'internal scratch']
  %s0 = inlined_call_operand.hbm [shape: f32[16,32], index: 0, kind: input, shape index: {}]
  %s1 = inlined_call_operand.hbm [shape: f32[32,96], index: 1, kind: input, shape index: {}]
  %s2 = inlined_call_operand.vmem [shape: f32[1,96], index: 2, kind: input, shape index: {}]
  %s3 = inlined_call_operand.hbm [shape: f32[32,32], index: 3, kind: input, shape index: {}]
  %s4 = inlined_call_operand.vmem [shape: f32[1,32], index: 4, kind: input, shape index: {}]
  %s5 = inlined_call_operand.hbm [shape: f32[16,32], index: 5, kind: output, shape index: {}]
  %s6 = sld [smem:[#allocation0]]
  $region42: #{tpu_custom_call.1} parent=0
    _
  %s8 = ssub.s32 1, %s6
  %s9 = scalar_select 0, %s8, %s6
  $region1: #{tpu_custom_call.1} parent=0
    #allocation2 [shape = 'u8[8192]{0}', space=vmem, size = 0x2000, scoped, tag = 'input window, operand 0, single buffered']
    #allocation3 [shape = 's32[1]{0}', space=sflag, size = 0x4, scoped, tag = 'scoped memory for tpu_custom_call.1']
    #allocation4 [shape = 's32[1]{0}', space=sflag, size = 0x4, scoped, tag = 'scoped memory for tpu_custom_call.1']
    #allocation5 [shape = 'u8[16384]{0}', space=vmem, size = 0x4000, scoped, tag = 'input window, operand 1, single buffered']
    #allocation6 [shape = 's32[1]{0}', space=sflag, size = 0x4, scoped, tag = 'scoped memory for tpu_custom_call.1']
    #allocation7 [shape = 'u8[16384]{0}', space=vmem, size = 0x4000, scoped, tag = 'input window, operand 3, single buffered']
    #allocation8 [shape = 'u8[8192]{0}', space=vmem, size = 0x2000, scoped, tag = 'output window, operand 0, single buffered']
    %10 = vsyncpa [#allocation3], 0
    %11 = vsyncpa [#allocation6], 0
    %12 = vsyncpa [#allocation4], 0
    // Predicated region
    $region2: #{tpu_custom_call.1} parent=1 // pred_check
      _
    $region3: #{tpu_custom_call.1} parent=1 // pred_check_branch
      %14 = sbr.rel (0) target = $region5
    $region4: #{tpu_custom_call.1} parent=1 // pred_region
      %16 = vsyncadd [#allocation3], 0
      %s17 = sshll.u32 %s0, 4
      %s18 = int_to_ptr.hbm [resolvable:$true] %s17
      %s19 = sshll.u32 [#allocation2], 4
      %s20 = int_to_ptr.vmem [resolvable:$true] %s19
      %25 = dma.hbm_to_vmem [thread:$0]  %s18, 256, %s20, [#allocation3], 128, 128, 8
    $region5: #{tpu_custom_call.1} parent=1 // pred_fallthru
      _
    // Predicated region
    $region6: #{tpu_custom_call.1} parent=1 // pred_check
      _
    $region7: #{tpu_custom_call.1} parent=1 // pred_check_branch
      %27 = sbr.rel (0) target = $region9
    $region8: #{tpu_custom_call.1} parent=1 // pred_region
      %29 = vsyncadd [#allocation6], 0
      %s30 = sshll.u32 %s1, 4
      %s31 = int_to_ptr.hbm [resolvable:$true] %s30
      %s32 = sshll.u32 [#allocation5], 4
      %s33 = int_to_ptr.vmem [resolvable:$true] %s32
      %38 = dma.hbm_to_vmem [thread:$0]  %s31, 512, %s33, [#allocation6], 128, 128, 8
    $region9: #{tpu_custom_call.1} parent=1 // pred_fallthru
      _
    // Predicated region
    $region10: #{tpu_custom_call.1} parent=1 // pred_check
      _
    $region11: #{tpu_custom_call.1} parent=1 // pred_check_branch
      %40 = sbr.rel (0) target = $region13
    $region12: #{tpu_custom_call.1} parent=1 // pred_region
      _
    $region13: #{tpu_custom_call.1} parent=1 // pred_fallthru
      _
    // Predicated region
    $region14: #{tpu_custom_call.1} parent=1 // pred_check
      _
    $region15: #{tpu_custom_call.1} parent=1 // pred_check_branch
      %42 = sbr.rel (0) target = $region17
    $region16: #{tpu_custom_call.1} parent=1 // pred_region
      %44 = vsyncadd [#allocation6], 0
      %s45 = sshll.u32 %s3, 4
      %s46 = int_to_ptr.hbm [resolvable:$true] %s45
      %s47 = sshll.u32 [#allocation7], 4
      %s48 = int_to_ptr.vmem [resolvable:$true] %s47
      %53 = dma.hbm_to_vmem [thread:$0]  %s46, 512, %s48, [#allocation6], 128, 128, 8
    $region17: #{tpu_custom_call.1} parent=1 // pred_fallthru
      _
    // Predicated region
    $region18: #{tpu_custom_call.1} parent=1 // pred_check
      _
    $region19: #{tpu_custom_call.1} parent=1 // pred_check_branch
      %55 = sbr.rel (0) target = $region21
    $region20: #{tpu_custom_call.1} parent=1 // pred_region
      _
    $region21: #{tpu_custom_call.1} parent=1 // pred_fallthru
      _
    // Predicated region
    $region22: #{tpu_custom_call.1} parent=1 // pred_check
      _
    $region23: #{tpu_custom_call.1} parent=1 // pred_check_branch
      %57 = sbr.rel (0) target = $region25
    $region24: #{tpu_custom_call.1} parent=1 // pred_region
      %59 = dma.done [#allocation3], 256
    $region25: #{tpu_custom_call.1} parent=1 // pred_fallthru
      _
    // Predicated region
    $region26: #{tpu_custom_call.1} parent=1 // pred_check
      _
    $region27: #{tpu_custom_call.1} parent=1 // pred_check_branch
      %61 = sbr.rel (0) target = $region29
    $region28: #{tpu_custom_call.1} parent=1 // pred_region
      %63 = dma.done [#allocation6], 512
    $region29: #{tpu_custom_call.1} parent=1 // pred_fallthru
      _
    // Predicated region
    $region30: #{tpu_custom_call.1} parent=1 // pred_check
      _
    $region31: #{tpu_custom_call.1} parent=1 // pred_check_branch
      %65 = sbr.rel (0) target = $region33
    $region32: #{tpu_custom_call.1} parent=1 // pred_region
      %67 = dma.done [#allocation6], 512
    $region33: #{tpu_custom_call.1} parent=1 // pred_fallthru
      _
    %v69 = vld [vmem:[#allocation2] sm:$0xff]
    %v70 = vld [vmem:[#allocation2 + $0x8] sm:$0xff]
    %v71 = vpack.c.bf16 %v70, %v69
    %v72 = vld [vmem:[#allocation5] sm:$0xff]
    %v73 = vld [vmem:[#allocation5 + $0x8] sm:$0xff]
    %v74 = vld [vmem:[#allocation5 + $0x10] sm:$0xff]
    %v75 = vld [vmem:[#allocation5 + $0x18] sm:$0xff]
    %v76 = vpack.c.bf16 %v73, %v72
    %v77 = vpack.c.bf16 %v75, %v74
    %v78 = vld [vmem:[%s2] sm:$0x1]
    %v80 = vperm.slane %v78, 0
    %vm82 = vcmask 261120
    %v84 = vsel %vm82, %v71, 0
    %86 = vmatpush.bf16.msra.mxu0 0
    %87 = vmatpush.bf16.msra.mxu0 0
    %88 = vmatpush.bf16.msra.mxu0 0
    %89 = vmatpush.bf16.msra.mxu0 0
    %90 = vmatpush.bf16.msra.mxu0 0
    %91 = vmatpush.bf16.msra.mxu0 0
    %92 = vmatpush.bf16.msra.mxu0 %v77
    %93 = vmatpush.bf16.msra.mxu0 %v76
    %94 = vmatmul.bf16.gmra.mxu0 %v84
    %v95 = vpop.f32.mrf.mxu0
    %v96 = vadd.f32 %v80, %v95
    %v97 = vpop.f32.mrf.mxu0
    %v98 = vadd.f32 %v80, %v97
    %99 = vdwg.mxu0
    %v100 = vmul.f32 %v96, 0.35355338
    %v101 = vmul.f32 %v98, 0.35355338
    %v102 = vlaneseq
    %v103 = vshrl.u32 %v102, 7
    %v104 = vlaneseq
    %v105 = vand.u32 %v104, 127
    %vm106 = vcmp.ge.s32.totalorder %v103, %v105
    %v107 = vpack.c.bf16 %v100, %v100
    %v108 = vpack.c.bf16 %v101, %v101
    %v109 = vpack.c.bf16 %v96, %v96
    %v110 = vpack.c.bf16 %v98, %v98
    %v112 = vunpack.c.l.b16 %v109
    %v113 = vpack.c.b16 %v112, %v112
    %114 = vrot.lane.b32.xlu0 %v113, 96
    %v115 = vpop.permute.xlu0 %114
    %vm116 = vcmask 64512
    %v118 = vsel %vm116, %v107, 0
    %v121 = vsel %vm116, %v115, 0
    %123 = vmatpush.bf16.xpose.msra.mxu0 0
    %124 = vmatpush.bf16.xpose.msra.mxu0 0
    %125 = vmatpush.bf16.xpose.msra.mxu0 0
    %126 = vmatpush.bf16.xpose.msra.mxu0 0
    %127 = vmatpush.bf16.xpose.msra.mxu0 0
    %128 = vmatpush.bf16.xpose.msra.mxu0 0
    %129 = vmatpush.bf16.xpose.msra.mxu0 0
    %130 = vmatpush.bf16.xpose.msra.mxu0 %v121
    %131 = vmatmul.bf16.gmra.mxu0 %v118
    %v132 = vpop.f32.mrf.mxu0
    %v133 = vadd.f32 0.0, %v132
    %v134 = vpop.f32.mrf.mxu0
    %135 = vdwg.mxu0
    %v137 = vunpack.c.l.b16 %v110
    %v138 = vpack.c.b16 %v137, %v137
    %139 = vrot.lane.b32.xlu0 %v138, 96
    %v140 = vpop.permute.xlu0 %139
    %v142 = vsel %vm116, %v108, 0
    %v145 = vsel %vm116, %v140, 0
    %147 = vmatpush.bf16.xpose.msra.mxu0 0
    %148 = vmatpush.bf16.xpose.msra.mxu0 0
    %149 = vmatpush.bf16.xpose.msra.mxu0 0
    %150 = vmatpush.bf16.xpose.msra.mxu0 0
    %151 = vmatpush.bf16.xpose.msra.mxu0 0
    %152 = vmatpush.bf16.xpose.msra.mxu0 0
    %153 = vmatpush.bf16.xpose.msra.mxu0 0
    %154 = vmatpush.bf16.xpose.msra.mxu0 %v145
    %155 = vmatmul.bf16.gmra.mxu0 %v142
    %v156 = vpop.f32.mrf.mxu0
    %v157 = vadd.f32 0.0, %v156
    %v158 = vpop.f32.mrf.mxu0
    %159 = vdwg.mxu0
    %v160 = vsel %vm106, 1, 0
    %vm161 = vcmp.eq.s32.totalorder %v160, 1
    %v162 = vsel %vm161, %v133, -1e+30
    %v163 = vsel %vm161, %v157, -1e+30
    %v164 = vsel %vm116, %v162, -inf
    %165 = vmax.xlane.f32.xlu0 %v164
    %v166 = vpop.xlane.xlu0 %165
    %v167 = vsel %vm116, %v163, -inf
    %168 = vmax.xlane.f32.xlu0 %v167
    %v169 = vpop.xlane.xlu0 %168
    %v170 = vsub.f32 %v162, %v166
    %v171 = vsub.f32 %v163, %v169
    %v172 = vmul.f32 %v170, 1.442695
    %v173 = vpow.pop %v172
    %v174 = vmul.f32 %v171, 1.442695
    %v175 = vpow.pop %v174
    %v176 = vsel %vm116, %v173, 0.0
    %177 = vadd.xlane.f32.xlu0 %v176
    %v178 = vpop.xlane.xlu0 %177
    %v179 = vsel %vm116, %v175, 0.0
    %180 = vadd.xlane.f32.xlu0 %v179
    %v181 = vpop.xlane.xlu0 %180
    %v182 = vrcp.pop %v178
    %v183 = vrcp.pop %v181
    %v184 = vmul.f32 %v173, %v182
    %v185 = vmul.f32 %v175, %v183
    %v186 = vpack.c.bf16 %v184, %v184
    %v187 = vpack.c.bf16 %v185, %v185
    %188 = vrot.lane.b32.xlu0 %v113, 64
    %v189 = vpop.permute.xlu0 %188
    %v191 = vsel %vm116, %v186, 0
    %vm193 = vcmask 1043456
    %v195 = vsel %vm193, %v189, 0
    %197 = vmatpush.bf16.msra.mxu0 0
    %198 = vmatpush.bf16.msra.mxu0 0
    %199 = vmatpush.bf16.msra.mxu0 0
    %200 = vmatpush.bf16.msra.mxu0 0
    %201 = vmatpush.bf16.msra.mxu0 0
    %202 = vmatpush.bf16.msra.mxu0 0
    %203 = vmatpush.bf16.msra.mxu0 0
    %204 = vmatpush.bf16.msra.mxu0 %v195
    %205 = vmatmul.bf16.gmra.mxu0 %v191
    %v206 = vpop.f32.mrf.mxu0
    %v207 = vadd.f32 0.0, %v206
    %v208 = vpop.f32.mrf.mxu0
    %209 = vdwg.mxu0
    %210 = vrot.lane.b32.xlu0 %v138, 64
    %v211 = vpop.permute.xlu0 %210
    %v213 = vsel %vm116, %v187, 0
    %v216 = vsel %vm193, %v211, 0
    %218 = vmatpush.bf16.msra.mxu0 0
    %219 = vmatpush.bf16.msra.mxu0 0
    %220 = vmatpush.bf16.msra.mxu0 0
    %221 = vmatpush.bf16.msra.mxu0 0
    %222 = vmatpush.bf16.msra.mxu0 0
    %223 = vmatpush.bf16.msra.mxu0 0
    %224 = vmatpush.bf16.msra.mxu0 0
    %225 = vmatpush.bf16.msra.mxu0 %v216
    %226 = vmatmul.bf16.gmra.mxu0 %v213
    %v227 = vpop.f32.mrf.mxu0
    %v228 = vadd.f32 0.0, %v227
    %v229 = vpop.f32.mrf.mxu0
    %230 = vdwg.mxu0
    %v232 = vunpack.c.l.b16 %v107
    %v233 = vpack.c.b16 %v232, %v232
    %234 = vrot.lane.b32.xlu0 %v233, 120
    %v235 = vpop.permute.xlu0 %234
    %236 = vrot.lane.b32.xlu0 %v113, 88
    %v237 = vpop.permute.xlu0 %236
    %v239 = vsel %vm116, %v235, 0
    %v242 = vsel %vm116, %v237, 0
    %244 = vmatpush.bf16.xpose.msra.mxu0 0
    %245 = vmatpush.bf16.xpose.msra.mxu0 0
    %246 = vmatpush.bf16.xpose.msra.mxu0 0
    %247 = vmatpush.bf16.xpose.msra.mxu0 0
    %248 = vmatpush.bf16.xpose.msra.mxu0 0
    %249 = vmatpush.bf16.xpose.msra.mxu0 0
    %250 = vmatpush.bf16.xpose.msra.mxu0 0
    %251 = vmatpush.bf16.xpose.msra.mxu0 %v242
    %252 = vmatmul.bf16.gmra.mxu0 %v239
    %v253 = vpop.f32.mrf.mxu0
    %v254 = vadd.f32 0.0, %v253
    %v255 = vpop.f32.mrf.mxu0
    %256 = vdwg.mxu0
    %v258 = vunpack.c.l.b16 %v108
    %v259 = vpack.c.b16 %v258, %v258
    %260 = vrot.lane.b32.xlu0 %v259, 120
    %v261 = vpop.permute.xlu0 %260
    %262 = vrot.lane.b32.xlu0 %v138, 88
    %v263 = vpop.permute.xlu0 %262
    %v265 = vsel %vm116, %v261, 0
    %v268 = vsel %vm116, %v263, 0
    %270 = vmatpush.bf16.xpose.msra.mxu0 0
    %271 = vmatpush.bf16.xpose.msra.mxu0 0
    %272 = vmatpush.bf16.xpose.msra.mxu0 0
    %273 = vmatpush.bf16.xpose.msra.mxu0 0
    %274 = vmatpush.bf16.xpose.msra.mxu0 0
    %275 = vmatpush.bf16.xpose.msra.mxu0 0
    %276 = vmatpush.bf16.xpose.msra.mxu0 0
    %277 = vmatpush.bf16.xpose.msra.mxu0 %v268
    %278 = vmatmul.bf16.gmra.mxu0 %v265
    %v279 = vpop.f32.mrf.mxu0
    %v280 = vadd.f32 0.0, %v279
    %v281 = vpop.f32.mrf.mxu0
    %282 = vdwg.mxu0
    %v283 = vsel %vm161, %v254, -1e+30
    %v284 = vsel %vm161, %v280, -1e+30
    %v285 = vsel %vm116, %v283, -inf
    %286 = vmax.xlane.f32.xlu0 %v285
    %v287 = vpop.xlane.xlu0 %286
    %v288 = vsel %vm116, %v284, -inf
    %289 = vmax.xlane.f32.xlu0 %v288
    %v290 = vpop.xlane.xlu0 %289
    %v291 = vsub.f32 %v283, %v287
    %v292 = vsub.f32 %v284, %v290
    %v293 = vmul.f32 %v291, 1.442695
    %v294 = vpow.pop %v293
    %v295 = vmul.f32 %v292, 1.442695
    %v296 = vpow.pop %v295
    %v297 = vsel %vm116, %v294, 0.0
    %298 = vadd.xlane.f32.xlu0 %v297
    %v299 = vpop.xlane.xlu0 %298
    %v300 = vsel %vm116, %v296, 0.0
    %301 = vadd.xlane.f32.xlu0 %v300
    %v302 = vpop.xlane.xlu0 %301
    %v303 = vrcp.pop %v299
    %v304 = vrcp.pop %v302
    %v305 = vmul.f32 %v294, %v303
    %v306 = vmul.f32 %v296, %v304
    %v307 = vpack.c.bf16 %v305, %v305
    %v308 = vpack.c.bf16 %v306, %v306
    %309 = vrot.lane.b32.xlu0 %v113, 56
    %v310 = vpop.permute.xlu0 %309
    %v312 = vsel %vm116, %v307, 0
    %v315 = vsel %vm193, %v310, 0
    %317 = vmatpush.bf16.msra.mxu0 0
    %318 = vmatpush.bf16.msra.mxu0 0
    %319 = vmatpush.bf16.msra.mxu0 0
    %320 = vmatpush.bf16.msra.mxu0 0
    %321 = vmatpush.bf16.msra.mxu0 0
    %322 = vmatpush.bf16.msra.mxu0 0
    %323 = vmatpush.bf16.msra.mxu0 0
    %324 = vmatpush.bf16.msra.mxu0 %v315
    %325 = vmatmul.bf16.gmra.mxu0 %v312
    %v326 = vpop.f32.mrf.mxu0
    %v327 = vadd.f32 0.0, %v326
    %v328 = vpop.f32.mrf.mxu0
    %329 = vdwg.mxu0
    %330 = vrot.lane.b32.xlu0 %v138, 56
    %v331 = vpop.permute.xlu0 %330
    %v333 = vsel %vm116, %v308, 0
    %v336 = vsel %vm193, %v331, 0
    %338 = vmatpush.bf16.msra.mxu0 0
    %339 = vmatpush.bf16.msra.mxu0 0
    %340 = vmatpush.bf16.msra.mxu0 0
    %341 = vmatpush.bf16.msra.mxu0 0
    %342 = vmatpush.bf16.msra.mxu0 0
    %343 = vmatpush.bf16.msra.mxu0 0
    %344 = vmatpush.bf16.msra.mxu0 0
    %345 = vmatpush.bf16.msra.mxu0 %v336
    %346 = vmatmul.bf16.gmra.mxu0 %v333
    %v347 = vpop.f32.mrf.mxu0
    %v348 = vadd.f32 0.0, %v347
    %v349 = vpop.f32.mrf.mxu0
    %350 = vdwg.mxu0
    %351 = vrot.lane.b32.xlu0 %v233, 112
    %v352 = vpop.permute.xlu0 %351
    %353 = vrot.lane.b32.xlu0 %v113, 80
    %v354 = vpop.permute.xlu0 %353
    %v356 = vsel %vm116, %v352, 0
    %v359 = vsel %vm116, %v354, 0
    %361 = vmatpush.bf16.xpose.msra.mxu0 0
    %362 = vmatpush.bf16.xpose.msra.mxu0 0
    %363 = vmatpush.bf16.xpose.msra.mxu0 0
    %364 = vmatpush.bf16.xpose.msra.mxu0 0
    %365 = vmatpush.bf16.xpose.msra.mxu0 0
    %366 = vmatpush.bf16.xpose.msra.mxu0 0
    %367 = vmatpush.bf16.xpose.msra.mxu0 0
    %368 = vmatpush.bf16.xpose.msra.mxu0 %v359
    %369 = vmatmul.bf16.gmra.mxu0 %v356
    %v370 = vpop.f32.mrf.mxu0
    %v371 = vadd.f32 0.0, %v370
    %v372 = vpop.f32.mrf.mxu0
    %373 = vdwg.mxu0
    %374 = vrot.lane.b32.xlu0 %v259, 112
    %v375 = vpop.permute.xlu0 %374
    %376 = vrot.lane.b32.xlu0 %v138, 80
    %v377 = vpop.permute.xlu0 %376
    %v379 = vsel %vm116, %v375, 0
    %v382 = vsel %vm116, %v377, 0
    %384 = vmatpush.bf16.xpose.msra.mxu0 0
    %385 = vmatpush.bf16.xpose.msra.mxu0 0
    %386 = vmatpush.bf16.xpose.msra.mxu0 0
    %387 = vmatpush.bf16.xpose.msra.mxu0 0
    %388 = vmatpush.bf16.xpose.msra.mxu0 0
    %389 = vmatpush.bf16.xpose.msra.mxu0 0
    %390 = vmatpush.bf16.xpose.msra.mxu0 0
    %391 = vmatpush.bf16.xpose.msra.mxu0 %v382
    %392 = vmatmul.bf16.gmra.mxu0 %v379
    %v393 = vpop.f32.mrf.mxu0
    %v394 = vadd.f32 0.0, %v393
    %v395 = vpop.f32.mrf.mxu0
    %396 = vdwg.mxu0
    %v397 = vsel %vm161, %v371, -1e+30
    %v398 = vsel %vm161, %v394, -1e+30
    %v399 = vsel %vm116, %v397, -inf
    %400 = vmax.xlane.f32.xlu0 %v399
    %v401 = vpop.xlane.xlu0 %400
    %v402 = vsel %vm116, %v398, -inf
    %403 = vmax.xlane.f32.xlu0 %v402
    %v404 = vpop.xlane.xlu0 %403
    %v405 = vsub.f32 %v397, %v401
    %v406 = vsub.f32 %v398, %v404
    %v407 = vmul.f32 %v405, 1.442695
    %v408 = vpow.pop %v407
    %v409 = vmul.f32 %v406, 1.442695
    %v410 = vpow.pop %v409
    %v411 = vsel %vm116, %v408, 0.0
    %412 = vadd.xlane.f32.xlu0 %v411
    %v413 = vpop.xlane.xlu0 %412
    %v414 = vsel %vm116, %v410, 0.0
    %415 = vadd.xlane.f32.xlu0 %v414
    %v416 = vpop.xlane.xlu0 %415
    %v417 = vrcp.pop %v413
    %v418 = vrcp.pop %v416
    %v419 = vmul.f32 %v408, %v417
    %v420 = vmul.f32 %v410, %v418
    %v421 = vpack.c.bf16 %v419, %v419
    %v422 = vpack.c.bf16 %v420, %v420
    %423 = vrot.lane.b32.xlu0 %v113, 48
    %v424 = vpop.permute.xlu0 %423
    %v426 = vsel %vm116, %v421, 0
    %v429 = vsel %vm193, %v424, 0
    %431 = vmatpush.bf16.msra.mxu0 0
    %432 = vmatpush.bf16.msra.mxu0 0
    %433 = vmatpush.bf16.msra.mxu0 0
    %434 = vmatpush.bf16.msra.mxu0 0
    %435 = vmatpush.bf16.msra.mxu0 0
    %436 = vmatpush.bf16.msra.mxu0 0
    %437 = vmatpush.bf16.msra.mxu0 0
    %438 = vmatpush.bf16.msra.mxu0 %v429
    %439 = vmatmul.bf16.gmra.mxu0 %v426
    %v440 = vpop.f32.mrf.mxu0
    %v441 = vadd.f32 0.0, %v440
    %v442 = vpop.f32.mrf.mxu0
    %443 = vdwg.mxu0
    %444 = vrot.lane.b32.xlu0 %v138, 48
    %v445 = vpop.permute.xlu0 %444
    %v447 = vsel %vm116, %v422, 0
    %v450 = vsel %vm193, %v445, 0
    %452 = vmatpush.bf16.msra.mxu0 0
    %453 = vmatpush.bf16.msra.mxu0 0
    %454 = vmatpush.bf16.msra.mxu0 0
    %455 = vmatpush.bf16.msra.mxu0 0
    %456 = vmatpush.bf16.msra.mxu0 0
    %457 = vmatpush.bf16.msra.mxu0 0
    %458 = vmatpush.bf16.msra.mxu0 0
    %459 = vmatpush.bf16.msra.mxu0 %v450
    %460 = vmatmul.bf16.gmra.mxu0 %v447
    %v461 = vpop.f32.mrf.mxu0
    %v462 = vadd.f32 0.0, %v461
    %v463 = vpop.f32.mrf.mxu0
    %464 = vdwg.mxu0
    %465 = vrot.lane.b32.xlu0 %v233, 104
    %v466 = vpop.permute.xlu0 %465
    %467 = vrot.lane.b32.xlu0 %v113, 72
    %v468 = vpop.permute.xlu0 %467
    %v470 = vsel %vm116, %v466, 0
    %v473 = vsel %vm116, %v468, 0
    %475 = vmatpush.bf16.xpose.msra.mxu0 0
    %476 = vmatpush.bf16.xpose.msra.mxu0 0
    %477 = vmatpush.bf16.xpose.msra.mxu0 0
    %478 = vmatpush.bf16.xpose.msra.mxu0 0
    %479 = vmatpush.bf16.xpose.msra.mxu0 0
    %480 = vmatpush.bf16.xpose.msra.mxu0 0
    %481 = vmatpush.bf16.xpose.msra.mxu0 0
    %482 = vmatpush.bf16.xpose.msra.mxu0 %v473
    %483 = vmatmul.bf16.gmra.mxu0 %v470
    %v484 = vpop.f32.mrf.mxu0
    %v485 = vadd.f32 0.0, %v484
    %v486 = vpop.f32.mrf.mxu0
    %487 = vdwg.mxu0
    %488 = vrot.lane.b32.xlu0 %v259, 104
    %v489 = vpop.permute.xlu0 %488
    %490 = vrot.lane.b32.xlu0 %v138, 72
    %v491 = vpop.permute.xlu0 %490
    %v493 = vsel %vm116, %v489, 0
    %v496 = vsel %vm116, %v491, 0
    %498 = vmatpush.bf16.xpose.msra.mxu0 0
    %499 = vmatpush.bf16.xpose.msra.mxu0 0
    %500 = vmatpush.bf16.xpose.msra.mxu0 0
    %501 = vmatpush.bf16.xpose.msra.mxu0 0
    %502 = vmatpush.bf16.xpose.msra.mxu0 0
    %503 = vmatpush.bf16.xpose.msra.mxu0 0
    %504 = vmatpush.bf16.xpose.msra.mxu0 0
    %505 = vmatpush.bf16.xpose.msra.mxu0 %v496
    %506 = vmatmul.bf16.gmra.mxu0 %v493
    %v507 = vpop.f32.mrf.mxu0
    %v508 = vadd.f32 0.0, %v507
    %v509 = vpop.f32.mrf.mxu0
    %510 = vdwg.mxu0
    %v511 = vsel %vm161, %v485, -1e+30
    %v512 = vsel %vm161, %v508, -1e+30
    %v513 = vsel %vm116, %v511, -inf
    %514 = vmax.xlane.f32.xlu0 %v513
    %v515 = vpop.xlane.xlu0 %514
    %v516 = vsel %vm116, %v512, -inf
    %517 = vmax.xlane.f32.xlu0 %v516
    %v518 = vpop.xlane.xlu0 %517
    %v519 = vsub.f32 %v511, %v515
    %v520 = vsub.f32 %v512, %v518
    %v521 = vmul.f32 %v519, 1.442695
    %v522 = vpow.pop %v521
    %v523 = vmul.f32 %v520, 1.442695
    %v524 = vpow.pop %v523
    %v525 = vsel %vm116, %v522, 0.0
    %526 = vadd.xlane.f32.xlu0 %v525
    %v527 = vpop.xlane.xlu0 %526
    %v528 = vsel %vm116, %v524, 0.0
    %529 = vadd.xlane.f32.xlu0 %v528
    %v530 = vpop.xlane.xlu0 %529
    %v531 = vrcp.pop %v527
    %v532 = vrcp.pop %v530
    %v533 = vmul.f32 %v522, %v531
    %v534 = vmul.f32 %v524, %v532
    %v535 = vpack.c.bf16 %v533, %v533
    %v536 = vpack.c.bf16 %v534, %v534
    %537 = vrot.lane.b32.xlu0 %v113, 40
    %v538 = vpop.permute.xlu0 %537
    %v540 = vsel %vm116, %v535, 0
    %v543 = vsel %vm193, %v538, 0
    %545 = vmatpush.bf16.msra.mxu0 0
    %546 = vmatpush.bf16.msra.mxu0 0
    %547 = vmatpush.bf16.msra.mxu0 0
    %548 = vmatpush.bf16.msra.mxu0 0
    %549 = vmatpush.bf16.msra.mxu0 0
    %550 = vmatpush.bf16.msra.mxu0 0
    %551 = vmatpush.bf16.msra.mxu0 0
    %552 = vmatpush.bf16.msra.mxu0 %v543
    %553 = vmatmul.bf16.gmra.mxu0 %v540
    %v554 = vpop.f32.mrf.mxu0
    %v555 = vadd.f32 0.0, %v554
    %v556 = vpop.f32.mrf.mxu0
    %557 = vdwg.mxu0
    %558 = vrot.lane.b32.xlu0 %v138, 40
    %v559 = vpop.permute.xlu0 %558
    %v561 = vsel %vm116, %v536, 0
    %v564 = vsel %vm193, %v559, 0
    %566 = vmatpush.bf16.msra.mxu0 0
    %567 = vmatpush.bf16.msra.mxu0 0
    %568 = vmatpush.bf16.msra.mxu0 0
    %569 = vmatpush.bf16.msra.mxu0 0
    %570 = vmatpush.bf16.msra.mxu0 0
    %571 = vmatpush.bf16.msra.mxu0 0
    %572 = vmatpush.bf16.msra.mxu0 0
    %573 = vmatpush.bf16.msra.mxu0 %v564
    %574 = vmatmul.bf16.gmra.mxu0 %v561
    %v575 = vpop.f32.mrf.mxu0
    %v576 = vadd.f32 0.0, %v575
    %v577 = vpop.f32.mrf.mxu0
    %578 = vdwg.mxu0
    %581 = vrot.lane.b32.xlu0 %v327, 8
    %v582 = vpop.permute.xlu0 %581
    %583 = vrot.lane.b32.xlu0 %v348, 8
    %v584 = vpop.permute.xlu0 %583
    %589 = vrot.lane.b32.xlu0 %v441, 16
    %v590 = vpop.permute.xlu0 %589
    %591 = vrot.lane.b32.xlu0 %v462, 16
    %v592 = vpop.permute.xlu0 %591
    %597 = vrot.lane.b32.xlu0 %v555, 24
    %v598 = vpop.permute.xlu0 %597
    %599 = vrot.lane.b32.xlu0 %v576, 24
    %v600 = vpop.permute.xlu0 %599
    %v603 = vsel %vm116, %v207, %v582
    %v604 = vsel %vm116, %v228, %v584
    %vm605 = vcmask 130048
    %v606 = vsel %vm605, %v603, %v590
    %v607 = vsel %vm605, %v604, %v592
    %vm608 = vcmask 195584
    %v609 = vsel %vm608, %v606, %v598
    %v610 = vsel %vm608, %v607, %v600
    %v611 = vpack.c.bf16 %v610, %v609
    %v612 = vld [vmem:[#allocation7] sm:$0xff]
    %v613 = vld [vmem:[#allocation7 + $0x8] sm:$0xff]
    %v614 = vld [vmem:[#allocation7 + $0x10] sm:$0xff]
    %v615 = vld [vmem:[#allocation7 + $0x18] sm:$0xff]
    %v616 = vpack.c.bf16 %v613, %v612
    %v617 = vpack.c.bf16 %v615, %v614
    %v618 = vld [vmem:[%s4] sm:$0x1]
    %v620 = vperm.slane %v618, 0
    %v623 = vsel %vm82, %v611, 0
    %625 = vmatpush.bf16.msra.mxu0 0
    %626 = vmatpush.bf16.msra.mxu0 0
    %627 = vmatpush.bf16.msra.mxu0 0
    %628 = vmatpush.bf16.msra.mxu0 0
    %629 = vmatpush.bf16.msra.mxu0 0
    %630 = vmatpush.bf16.msra.mxu0 0
    %631 = vmatpush.bf16.msra.mxu0 %v617
    %632 = vmatpush.bf16.msra.mxu0 %v616
    %633 = vmatmul.bf16.gmra.mxu0 %v623
    %v634 = vpop.f32.mrf.mxu0
    %v635 = vadd.f32 %v620, %v634
    %v636 = vpop.f32.mrf.mxu0
    %v637 = vadd.f32 %v620, %v636
    %638 = vdwg.mxu0
    %639 = vst.msk [vmem:[#allocation8] sm:$0xff] %vm82, %v635
    %640 = vst.msk [vmem:[#allocation8 + $0x8] sm:$0xff] %vm82, %v637
    // Predicated region
    $region34: #{tpu_custom_call.1} parent=1 // pred_check
      _
    $region35: #{tpu_custom_call.1} parent=1 // pred_check_branch
      %642 = sbr.rel (0) target = $region37
    $region36: #{tpu_custom_call.1} parent=1 // pred_region
      %644 = vsyncadd [#allocation4], 0
      %s645 = sshll.u32 [#allocation8], 4
      %s646 = int_to_ptr.vmem [resolvable:$true] %s645
      %s647 = sshll.u32 %s5, 4
      %s648 = int_to_ptr.hbm [resolvable:$true] %s647
      %653 = dma.vmem_to_hbm [thread:$0]  %s646, 256, %s648, [#allocation4], 128, 128, 8
    $region37: #{tpu_custom_call.1} parent=1 // pred_fallthru
      _
    // Predicated region
    $region38: #{tpu_custom_call.1} parent=1 // pred_check
      _
    $region39: #{tpu_custom_call.1} parent=1 // pred_check_branch
      %655 = sbr.rel (0) target = $region41
    $region40: #{tpu_custom_call.1} parent=1 // pred_region
      %657 = dma.done [#allocation4], 256
    $region41: #{tpu_custom_call.1} parent=1 // pred_fallthru
      _
    %658 = vsyncpa [#allocation3], 1
    %659 = vsyncpa [#allocation6], 1
    %660 = vsyncpa [#allocation4], 1

</llo_original>
